<compile_context>
chip_gen: v5e
topology: v5e:2x2
jax: 0.10.0
libtpu: 0.0.40
codegen_flags: <defaults>
</compile_context>

<pallas_src>
import jax
import jax.numpy as jnp
from jax import lax
from jax.experimental import pallas as pl
from jax.experimental.pallas import tpu as pltpu

_LANES = 128
# box=False: 1 input + 3 output planes  -> 4096*128*4*4 = 8 MiB / step, ~16 MiB double-buffered.
# box=True : 1 input + 1 output plane   -> 8192*128*4*2 = 8 MiB / step, ~16 MiB double-buffered.
_ROW_TILE_FULL = 4096
_ROW_TILE_BOX = 8192


def _spu(x):
    # SPU(x) = x^2 - 0.5 if x > 0 else sigmoid(-x) - 1.
    # exp(x) overflows to +inf for large positive x -> sigmoid branch gives -1 there,
    # which the where() masks out.  Intentional; do not "fix" with NaN/inf checks.
    sig = 1.0 / (1.0 + jnp.exp(x))
    return jnp.where(x > 0.0, x * x - 0.5, sig - 1.0)


def _lane_deinterleave(x):
    """x holds (l, u) pairs lane-interleaved (even lanes = l, odd lanes = u).

    Returns (even_mask, l, u, vl, vu), each broadcast to every lane, using XLU lane
    rotations + parity selects.  roll(+1) brings lane i-1 to lane i (l -> odd lanes);
    roll(+127) == roll(-1) brings lane i+1 to lane i (u -> even lanes).  Wrap-around
    lanes are masked by the parity select, so pairs never mix across rows.
    """
    vx = _spu(x)
    last = x.ndim - 1
    lane = lax.broadcasted_iota(jnp.int32, x.shape, dimension=last)
    even = (lane & 1) == 0
    x_m1 = pltpu.roll(x, 1, last)
    x_p1 = pltpu.roll(x, _LANES - 1, last)
    v_m1 = pltpu.roll(vx, 1, last)
    v_p1 = pltpu.roll(vx, _LANES - 1, last)
    l = jnp.where(even, x, x_m1)
    u = jnp.where(even, x_p1, x)
    vl = jnp.where(even, vx, v_m1)
    vu = jnp.where(even, v_p1, vx)
    return even, l, u, vl, vu


def _spu_kernel_full(x_ref, bounds_ref, slopes_ref, shifts_ref):
    """box=False: one (tr, 128) lane-interleaved tile -> (bounds, slopes, shifts) tiles."""
    x = x_ref[...]
    even, l, u, vl, vu = _lane_deinterleave(x)
    zeros = jnp.zeros_like(x)

    neg = u <= 0.0
    pos = l >= 0.0
    cross = jnp.logical_not(jnp.logical_or(neg, pos))

    # True division: 0/0 -> NaN for degenerate (u == l) bounds, matching torch.div.
    all_slopes = (vu - vl) / (u - l)
    cross_pos = jnp.logical_and(cross, all_slopes >= 0.0)
    cross_neg = jnp.logical_and(cross, all_slopes < 0.0)
    pos_or_cp = jnp.logical_or(pos, cross_pos)

    # slopes (lower / upper)
    slope_l = jnp.where(neg, all_slopes, zeros)
    slope_u = jnp.where(pos_or_cp, all_slopes, zeros)

    # shifts — sequential write order of the torch reference preserved
    shift_u = jnp.where(neg, vl, zeros)
    shift_u = jnp.where(pos_or_cp, vu - all_slopes * u, shift_u)
    shift_u = jnp.where(cross_neg, vl, shift_u)

    shift_l = jnp.where(neg, vl - all_slopes * l, zeros)
    shift_l = jnp.where(pos, vl, shift_l)
    shift_l = jnp.where(cross, -0.5, shift_l)

    # bounds — torch overwrites the neg rows a second time (pos rows keep zero init)
    bound_u = jnp.where(neg, vu, zeros)
    bound_u = jnp.where(cross_pos, vu, bound_u)
    bound_u = jnp.where(cross_neg, vl, bound_u)

    bound_l = jnp.where(neg, vl, zeros)
    bound_l = jnp.where(cross_pos, -0.5, bound_l)

    # emit lane-interleaved (even lane = col 0, odd lane = col 1) -> [N,2] is a free reshape
    bounds_ref[...] = jnp.where(even, bound_l, bound_u)
    slopes_ref[...] = jnp.where(even, slope_l, slope_u)
    shifts_ref[...] = jnp.where(even, shift_l, shift_u)


def _spu_kernel_box(x_ref, shifts_ref):
    """box=True: only shifts are produced (bounds == shifts, slopes identically 0)."""
    x = x_ref[...]
    even, l, u, vl, vu = _lane_deinterleave(x)
    zeros = jnp.zeros_like(x)

    neg = u <= 0.0
    pos = l >= 0.0
    cross = jnp.logical_not(jnp.logical_or(neg, pos))

    shift_u = jnp.where(neg, vl, zeros)
    shift_l = jnp.where(neg, vu, zeros)
    shift_u = jnp.where(pos, vu, shift_u)
    shift_l = jnp.where(pos, vl, shift_l)
    shift_u = jnp.where(cross, jnp.maximum(vl, vu), shift_u)
    shift_l = jnp.where(cross, -0.5, shift_l)

    shifts_ref[...] = jnp.where(even, shift_l, shift_u)


def spu_transformer_forward_dense(bounds_rl, *, box=False, row_tile=None):
    """Dense-layout entry point.

    bounds_rl: (R, 128) float32, lane-interleaved (l, u) pairs (even lane = lower,
               odd lane = upper); 64 neurons per row.
    Returns a tuple of (R, 128) lane-interleaved planes:
      box=False -> (bounds, slopes, shifts);  box=True -> (shifts,).
    Rows belonging to degenerate/padded pairs may contain NaN (0/0 slope) — callers
    must slice them off and must not enable NaN debug checks on this kernel.
    """
    r, lanes = bounds_rl.shape
    assert lanes == _LANES, "last dim must be 128 lanes"
    if row_tile is None:
        row_tile = _ROW_TILE_BOX if box else _ROW_TILE_FULL
    tr = min(row_tile, r)
    if tr < r:
        tr = max(8, (tr // 8) * 8)  # block rows must be a multiple of 8 unless == full dim

    n_out = 1 if box else 3
    kernel = _spu_kernel_box if box else _spu_kernel_full
    out_shape = tuple(jax.ShapeDtypeStruct((r, _LANES), jnp.float32) for _ in range(n_out))
    out_specs = tuple(pl.BlockSpec((tr, _LANES), lambda i: (i, 0)) for _ in range(n_out))

    return pl.pallas_call(
        kernel,
        out_shape=out_shape,
        grid=(pl.cdiv(r, tr),),
        in_specs=[pl.BlockSpec((tr, _LANES), lambda i: (i, 0))],
        out_specs=out_specs,
        compiler_params=pltpu.CompilerParams(
            # TODO(synk): on v7x verify the grid actually shards across both TensorCores
            # with "parallel"; if not, switch to pltpu.CORE_PARALLEL / a core_map axis.
            dimension_semantics=("parallel",),
            vmem_limit_bytes=32 * 1024 * 1024,  # ~16 MiB actually used (double-buffered)
        ),
    )(bounds_rl)


def spu_transformer_forward(bounds_n2, *, box=False):
    """Torch-compatible API: bounds_n2 [N, 2] (col 0 = lower, col 1 = upper).

    Returns (bounds, slopes, shifts), each [N, 2]; `bounds` is the module's return value,
    slopes/shifts mirror the attributes set in forward().  All layout changes around the
    kernel are free reshapes (the [N,2] row-major buffer IS the lane-interleaved layout).
    """
    # TODO(synk): back_sub / _back_sub_from_top_layer need the preceding layer (`self.last`);
    # steps_backsub defaults to 0 so that path is not exercised here.
    n = bounds_n2.shape[0]
    flat = bounds_n2.astype(jnp.float32).reshape(-1)  # [l0,u0,l1,u1,...] — free reshape
    total = 2 * n
    total_pad = ((total + _LANES - 1) // _LANES) * _LANES
    if total_pad != total:
        # Padded pairs become (1,1): degenerate, may produce NaN slopes in padded lanes;
        # they are sliced off below (single jnp.pad, no tile+concatenate copy).
        flat = jnp.pad(flat, (0, total_pad - total), constant_values=1.0)
    dense = flat.reshape(total_pad // _LANES, _LANES)  # lane-interleaved (l, u)

    outs = spu_transformer_forward_dense(dense, box=box)

    def unpack(plane):
        return plane.reshape(total_pad // 2, 2)[:n]  # free reshape + tail slice

    if box:
        shifts = unpack(outs[0])
        bounds = shifts                      # self.bounds = self.shifts
        slopes = jnp.zeros_like(shifts)      # never written in the box path; API parity only
        return bounds, slopes, shifts
    return unpack(outs[0]), unpack(outs[1]), unpack(outs[2])


# ----------------------------------------------------------------------------
# Pure-JAX reference (replicates the torch forward) for verification.
# ----------------------------------------------------------------------------
def _spu_ref(x):
    return jnp.where(x > 0.0, x * x - 0.5, 1.0 / (1.0 + jnp.exp(x)) - 1.0)


def _reference_forward(bounds_n2, box=False):
    l = bounds_n2[:, 0]
    u = bounds_n2[:, 1]
    vl = _spu_ref(l)
    vu = _spu_ref(u)
    zeros = jnp.zeros_like(l)
    neg = u <= 0.0
    pos = l >= 0.0
    cross = jnp.logical_not(jnp.logical_or(neg, pos))
    if box:
        su = jnp.where(neg, vl, zeros)
        sl = jnp.where(neg, vu, zeros)
        su = jnp.where(pos, vu, su)
        sl = jnp.where(pos, vl, sl)
        su = jnp.where(cross, jnp.maximum(vl, vu), su)
        sl = jnp.where(cross, -0.5, sl)
        shifts = jnp.stack([sl, su], axis=1)
        return shifts, jnp.zeros_like(shifts), shifts

    all_slopes = (vu - vl) / (u - l)
    cross_pos = jnp.logical_and(cross, all_slopes >= 0.0)
    cross_neg = jnp.logical_and(cross, all_slopes < 0.0)

    slope_l = jnp.where(neg, all_slopes, zeros)
    slope_u = jnp.where(jnp.logical_or(pos, cross_pos), all_slopes, zeros)

    shift_u = jnp.where(neg, vl, zeros)
    shift_u = jnp.where(jnp.logical_or(pos, cross_pos), vu - all_slopes * u, shift_u)
    shift_u = jnp.where(cross_neg, vl, shift_u)

    shift_l = jnp.where(neg, vl - all_slopes * l, zeros)
    shift_l = jnp.where(pos, vl, shift_l)
    shift_l = jnp.where(cross, -0.5, shift_l)

    bound_u = jnp.where(neg, vu, zeros)
    bound_u = jnp.where(cross_pos, vu, bound_u)
    bound_u = jnp.where(cross_neg, vl, bound_u)

    bound_l = jnp.where(neg, vl, zeros)
    bound_l = jnp.where(cross_pos, -0.5, bound_l)

    return (jnp.stack([bound_l, bound_u], axis=1),
            jnp.stack([slope_l, slope_u], axis=1),
            jnp.stack([shift_l, shift_u], axis=1))


if __name__ == "__main__":
    key = jax.random.PRNGKey(0)
    for n in (16, 700):  # 700 exercises lane padding + tail slicing
        k1, k2 = jax.random.split(jax.random.fold_in(key, n))
        lo = jax.random.normal(k1, (n,), dtype=jnp.float32)
        hi = lo + jnp.abs(jax.random.normal(k2, (n,), dtype=jnp.float32)) + 0.1
        bounds_in = jnp.stack([lo, hi], axis=1)  # [N, 2], col 0 = lower, col 1 = upper

        for box in (False, True):
            out = spu_transformer_forward(bounds_in, box=box)
            jax.block_until_ready(out)
            ref = _reference_forward(bounds_in, box=box)
            for name, got, want in zip(("bounds", "slopes", "shifts"), out, ref):
                assert got.shape == (n, 2), (name, got.shape)
                assert bool(jnp.allclose(got, want, atol=1e-5, rtol=1e-5)), \
                    f"Pallas {name} mismatch (n={n}, box={box})"

    # NOTE: the torch module ends with `assert bounds[:,0] <= bounds[:,1]`, which its own
    # negative-branch rewrite can violate; we reproduce the returned values, not the
    # runtime assert/print side effects.
    print("KERNEL_OK")
</pallas_src>

<mosaic_0001>
module attributes {stable_mosaic.version = 11 : i64} {
  func.func @_spu_kernel_full(%arg0: i32, %arg1: memref<1x128xf32, #tpu.memory_space<vmem>>, %arg2: memref<1x128xf32, #tpu.memory_space<vmem>>, %arg3: memref<1x128xf32, #tpu.memory_space<vmem>>, %arg4: memref<1x128xf32, #tpu.memory_space<vmem>>) attributes {dimension_semantics = [#tpu.dimension_semantics<parallel>], iteration_bounds = array<i64: 1>, scalar_prefetch = 0 : i64, scratch_operands = 0 : i64, tpu.core_type = #tpu.core_type<tc>, window_params = [{transform_indices = @transform_0, window_bounds = array<i64: 1, 128>}, {transform_indices = @transform_1, window_bounds = array<i64: 1, 128>}, {transform_indices = @transform_2, window_bounds = array<i64: 1, 128>}, {transform_indices = @transform_3, window_bounds = array<i64: 1, 128>}]} {
    %c0 = arith.constant 0 : index
    %c0_0 = arith.constant 0 : index
    %0 = vector.load %arg1[%c0, %c0_0] : memref<1x128xf32, #tpu.memory_space<vmem>>, vector<1x128xf32>
    %1 = math.exp %0 : vector<1x128xf32>
    %cst = arith.constant 1.000000e+00 : f32
    %2 = vector.broadcast %cst : f32 to vector<1x128xf32>
    %3 = arith.addf %2, %1 : vector<1x128xf32>
    %cst_1 = arith.constant 1.000000e+00 : f32
    %4 = vector.broadcast %cst_1 : f32 to vector<1x128xf32>
    %5 = arith.divf %4, %3 : vector<1x128xf32>
    %cst_2 = arith.constant 0.000000e+00 : f32
    %6 = vector.broadcast %cst_2 : f32 to vector<1x128xf32>
    %7 = arith.cmpf ogt, %0, %6 : vector<1x128xf32>
    %8 = arith.mulf %0, %0 : vector<1x128xf32>
    %cst_3 = arith.constant 5.000000e-01 : f32
    %9 = vector.broadcast %cst_3 : f32 to vector<1x128xf32>
    %10 = arith.subf %8, %9 : vector<1x128xf32>
    %cst_4 = arith.constant 1.000000e+00 : f32
    %11 = vector.broadcast %cst_4 : f32 to vector<1x128xf32>
    %12 = arith.subf %5, %11 : vector<1x128xf32>
    %13 = arith.select %7, %10, %12 : vector<1x128xi1>, vector<1x128xf32>
    %14 = tpu.iota {dimensions = array<i32: 1>} : vector<1x128xi32>
    %c1_i32 = arith.constant 1 : i32
    %15 = vector.broadcast %c1_i32 : i32 to vector<1x128xi32>
    %16 = arith.andi %14, %15 : vector<1x128xi32>
    %c0_i32 = arith.constant 0 : i32
    %17 = vector.broadcast %c0_i32 : i32 to vector<1x128xi32>
    %18 = arith.cmpi eq, %16, %17 : vector<1x128xi32>
    %c1_i32_5 = arith.constant 1 : i32
    %19 = tpu.dynamic_rotate %0 by %c1_i32_5 dim 1 : vector<1x128xf32>, i32 -> vector<1x128xf32>
    %c127_i32 = arith.constant 127 : i32
    %20 = tpu.dynamic_rotate %0 by %c127_i32 dim 1 : vector<1x128xf32>, i32 -> vector<1x128xf32>
    %c1_i32_6 = arith.constant 1 : i32
    %21 = tpu.dynamic_rotate %13 by %c1_i32_6 dim 1 : vector<1x128xf32>, i32 -> vector<1x128xf32>
    %c127_i32_7 = arith.constant 127 : i32
    %22 = tpu.dynamic_rotate %13 by %c127_i32_7 dim 1 : vector<1x128xf32>, i32 -> vector<1x128xf32>
    %23 = arith.select %18, %0, %19 : vector<1x128xi1>, vector<1x128xf32>
    %24 = arith.select %18, %20, %0 : vector<1x128xi1>, vector<1x128xf32>
    %25 = arith.select %18, %13, %21 : vector<1x128xi1>, vector<1x128xf32>
    %26 = arith.select %18, %22, %13 : vector<1x128xi1>, vector<1x128xf32>
    %cst_8 = arith.constant 0.000000e+00 : f32
    %27 = vector.broadcast %cst_8 : f32 to vector<1x128xf32>
    %cst_9 = arith.constant 0.000000e+00 : f32
    %28 = vector.broadcast %cst_9 : f32 to vector<1x128xf32>
    %29 = arith.cmpf ole, %24, %28 : vector<1x128xf32>
    %cst_10 = arith.constant 0.000000e+00 : f32
    %30 = vector.broadcast %cst_10 : f32 to vector<1x128xf32>
    %31 = arith.cmpf oge, %23, %30 : vector<1x128xf32>
    %32 = arith.ori %29, %31 : vector<1x128xi1>
    %cst_11 = arith.constant dense<true> : vector<1x128xi1>
    %33 = arith.xori %32, %cst_11 : vector<1x128xi1>
    %34 = arith.subf %26, %25 : vector<1x128xf32>
    %35 = arith.subf %24, %23 : vector<1x128xf32>
    %36 = arith.divf %34, %35 : vector<1x128xf32>
    %cst_12 = arith.constant 0.000000e+00 : f32
    %37 = vector.broadcast %cst_12 : f32 to vector<1x128xf32>
    %38 = arith.cmpf oge, %36, %37 : vector<1x128xf32>
    %39 = arith.andi %33, %38 : vector<1x128xi1>
    %cst_13 = arith.constant 0.000000e+00 : f32
    %40 = vector.broadcast %cst_13 : f32 to vector<1x128xf32>
    %41 = arith.cmpf olt, %36, %40 : vector<1x128xf32>
    %42 = arith.andi %33, %41 : vector<1x128xi1>
    %43 = arith.ori %31, %39 : vector<1x128xi1>
    %44 = arith.select %29, %36, %27 : vector<1x128xi1>, vector<1x128xf32>
    %45 = arith.select %43, %36, %27 : vector<1x128xi1>, vector<1x128xf32>
    %46 = arith.select %29, %25, %27 : vector<1x128xi1>, vector<1x128xf32>
    %47 = arith.mulf %36, %24 : vector<1x128xf32>
    %48 = arith.subf %26, %47 : vector<1x128xf32>
    %49 = arith.select %43, %48, %46 : vector<1x128xi1>, vector<1x128xf32>
    %50 = arith.select %42, %25, %49 : vector<1x128xi1>, vector<1x128xf32>
    %51 = arith.mulf %36, %23 : vector<1x128xf32>
    %52 = arith.subf %25, %51 : vector<1x128xf32>
    %53 = arith.select %29, %52, %27 : vector<1x128xi1>, vector<1x128xf32>
    %54 = arith.select %31, %25, %53 : vector<1x128xi1>, vector<1x128xf32>
    %cst_14 = arith.constant -5.000000e-01 : f32
    %55 = vector.broadcast %cst_14 : f32 to vector<1x128xf32>
    %56 = arith.select %33, %55, %54 : vector<1x128xi1>, vector<1x128xf32>
    %57 = arith.select %29, %26, %27 : vector<1x128xi1>, vector<1x128xf32>
    %58 = arith.select %39, %26, %57 : vector<1x128xi1>, vector<1x128xf32>
    %59 = arith.select %42, %25, %58 : vector<1x128xi1>, vector<1x128xf32>
    %60 = arith.select %29, %25, %27 : vector<1x128xi1>, vector<1x128xf32>
    %cst_15 = arith.constant -5.000000e-01 : f32
    %61 = vector.broadcast %cst_15 : f32 to vector<1x128xf32>
    %62 = arith.select %39, %61, %60 : vector<1x128xi1>, vector<1x128xf32>
    %63 = arith.select %18, %62, %59 : vector<1x128xi1>, vector<1x128xf32>
    %c0_16 = arith.constant 0 : index
    %c0_17 = arith.constant 0 : index
    %64 = vector.load %arg2[%c0_16, %c0_17] : memref<1x128xf32, #tpu.memory_space<vmem>>, vector<1x128xf32>
    tpu.vector_store %arg2[%c0_16, %c0_17], %63 {strides = array<i32>} : memref<1x128xf32, #tpu.memory_space<vmem>>, vector<1x128xf32>,
    %65 = arith.select %18, %44, %45 : vector<1x128xi1>, vector<1x128xf32>
    %c0_18 = arith.constant 0 : index
    %c0_19 = arith.constant 0 : index
    %66 = vector.load %arg3[%c0_18, %c0_19] : memref<1x128xf32, #tpu.memory_space<vmem>>, vector<1x128xf32>
    tpu.vector_store %arg3[%c0_18, %c0_19], %65 {strides = array<i32>} : memref<1x128xf32, #tpu.memory_space<vmem>>, vector<1x128xf32>,
    %67 = arith.select %18, %56, %50 : vector<1x128xi1>, vector<1x128xf32>
    %c0_20 = arith.constant 0 : index
    %c0_21 = arith.constant 0 : index
    %68 = vector.load %arg4[%c0_20, %c0_21] : memref<1x128xf32, #tpu.memory_space<vmem>>, vector<1x128xf32>
    tpu.vector_store %arg4[%c0_20, %c0_21], %67 {strides = array<i32>} : memref<1x128xf32, #tpu.memory_space<vmem>>, vector<1x128xf32>,
    return
  }
  func.func @transform_0(%arg0: i32) -> (i32, i32) {
    %c0_i32 = arith.constant 0 : i32
    %c0_i32_0 = arith.constant 0 : i32
    return %arg0, %c0_i32 : i32, i32
  }
  func.func @transform_1(%arg0: i32) -> (i32, i32) {
    %c0_i32 = arith.constant 0 : i32
    %c0_i32_0 = arith.constant 0 : i32
    return %arg0, %c0_i32 : i32, i32
  }
  func.func @transform_2(%arg0: i32) -> (i32, i32) {
    %c0_i32 = arith.constant 0 : i32
    %c0_i32_0 = arith.constant 0 : i32
    return %arg0, %c0_i32 : i32, i32
  }
  func.func @transform_3(%arg0: i32) -> (i32, i32) {
    %c0_i32 = arith.constant 0 : i32
    %c0_i32_0 = arith.constant 0 : i32
    return %arg0, %c0_i32 : i32, i32
  }
}

</mosaic_0001>

<llo_original>
// kernel: tpu_custom_call.1
$region0: #{tpu_custom_call.1}
  #allocation0 [shape = 'u32[]', space=smem, size = 0x4, offset = 0x4, fixed_abs, tag = 'smem constant byte address 0x4 - core index']
  #allocation1 [shape = 'u32[72,128]{1,0:T(1,128)}', space=vmem, size = 0x9000, scoped, tag = 'internal scratch']
  %s0 = inlined_call_operand.hbm [shape: f32[1,128], index: 0, kind: input, shape index: {}]
  %s1 = inlined_call_operand.hbm [shape: f32[1,128], index: 1, kind: output, shape index: {0}]
  %s2 = inlined_call_operand.hbm [shape: f32[1,128], index: 2, kind: output, shape index: {1}]
  %s3 = inlined_call_operand.hbm [shape: f32[1,128], index: 3, kind: output, shape index: {2}]
  %4 = xla_tuple %s1, %s2, %s3
  %s5 = sld [smem:[#allocation0]]
  $region34: #{tpu_custom_call.1} parent=0
    _
  %s7 = ssub.s32 1, %s5
  %s8 = scalar_select 0, %s7, %s5
  $region1: #{tpu_custom_call.1} parent=0
    #allocation2 [shape = 'u8[512]{0}', space=vmem, size = 0x400, scoped, tag = 'input window, operand 0, single buffered']
    #allocation3 [shape = 's32[1]{0}', space=sflag, size = 0x4, scoped, tag = 'scoped memory for tpu_custom_call.1']
    #allocation4 [shape = 's32[1]{0}', space=sflag, size = 0x4, scoped, tag = 'scoped memory for tpu_custom_call.1']
    #allocation5 [shape = 'u8[512]{0}', space=vmem, size = 0x400, scoped, tag = 'output window, operand 0, single buffered']
    #allocation6 [shape = 'u8[512]{0}', space=vmem, size = 0x400, scoped, tag = 'output window, operand 1, single buffered']
    #allocation7 [shape = 's32[1]{0}', space=sflag, size = 0x4, scoped, tag = 'scoped memory for tpu_custom_call.1']
    #allocation8 [shape = 'u8[512]{0}', space=vmem, size = 0x400, scoped, tag = 'output window, operand 2, single buffered']
    %9 = vsyncpa [#allocation3], 0
    %10 = vsyncpa [#allocation4], 0
    %11 = vsyncpa [#allocation7], 0
    // Predicated region
    $region2: #{tpu_custom_call.1} parent=1 // pred_check
      _
    $region3: #{tpu_custom_call.1} parent=1 // pred_check_branch
      %13 = sbr.rel (0) target = $region5
    $region4: #{tpu_custom_call.1} parent=1 // pred_region
      %15 = vsyncadd [#allocation3], 0
      %s17 = sshll.u32 %s0, 4
      %s18 = int_to_ptr.hbm [resolvable:$true] %s17
      %s19 = sshll.u32 [#allocation2], 4
      %s20 = int_to_ptr.vmem [resolvable:$true] %s19
      %22 = dma.hbm_to_vmem [thread:$0]  %s18, 16, %s20, [#allocation3]
    $region5: #{tpu_custom_call.1} parent=1 // pred_fallthru
      _
    // Predicated region
    $region6: #{tpu_custom_call.1} parent=1 // pred_check
      _
    $region7: #{tpu_custom_call.1} parent=1 // pred_check_branch
      %24 = sbr.rel (0) target = $region9
    $region8: #{tpu_custom_call.1} parent=1 // pred_region
      %26 = dma.done [#allocation3], 16
    $region9: #{tpu_custom_call.1} parent=1 // pred_fallthru
      _
    %v27 = vld [vmem:[#allocation2] sm:$0x1]
    %v28 = vmul.f32 %v27, 1.442695
    %v29 = vpow.pop %v28
    %v30 = vadd.f32 %v29, 1.0
    %v31 = vrcp.pop %v30
    %v32 = vmul.f32 %v30, %v31
    %v33 = vsub.f32 1.0, %v32
    %v34 = vmul.f32 %v31, %v33
    %v35 = vadd.f32 %v31, %v34
    %vm36 = vweird.f32 %v30
    %vm37 = vweird.f32 %v31
    %vm38 = vmor %vm36, %vm37
    %v39 = vsel %vm38, %v31, %v35
    %v40 = vand.u32 2147483647, %v30
    %vm41 = vcmp.eq.f32.partialorder %v40, 8.507059e+37
    %v42 = vand.u32 %v30, 2147483648
    %v43 = vor.u32 1.1754944e-38, %v42
    %v44 = vsel %vm41, %v43, %v39
    %v45 = vmul.f32 1.0, %v44
    %vm46 = vcmp.gt.f32.partialorder %v27, 0.0
    %v47 = vmul.f32 %v27, %v27
    %v48 = vsub.f32 %v47, 0.5
    %v49 = vsub.f32 %v45, 1.0
    %v50 = vsel %vm46, %v48, %v49
    %v51 = vlaneseq
    %v52 = vand.u32 %v51, 127
    %v53 = vand.u32 %v52, 1
    %vm54 = vcmp.eq.s32.totalorder %v53, 0
    %55 = vrot.lane.b32.xlu0 %v27, 1
    %v56 = vpop.permute.xlu0 %55
    %57 = vrot.lane.b32.xlu0 %v27, 127
    %v58 = vpop.permute.xlu0 %57
    %59 = vrot.lane.b32.xlu0 %v50, 1
    %v60 = vpop.permute.xlu0 %59
    %61 = vrot.lane.b32.xlu0 %v50, 127
    %v62 = vpop.permute.xlu0 %61
    %v63 = vsel %vm54, %v27, %v56
    %v64 = vsel %vm54, %v58, %v27
    %v65 = vsel %vm54, %v50, %v60
    %v66 = vsel %vm54, %v62, %v50
    %vm67 = vcmp.le.f32.partialorder %v64, 0.0
    %vm68 = vcmp.ge.f32.partialorder %v63, 0.0
    %vm69 = vmor %vm67, %vm68
    %vm70 = vmxor %vm69, 1
    %v71 = vsub.f32 %v66, %v65
    %v72 = vsub.f32 %v64, %v63
    %v73 = vrcp.pop %v72
    %v74 = vmul.f32 %v72, %v73
    %v75 = vsub.f32 1.0, %v74
    %v76 = vmul.f32 %v73, %v75
    %v77 = vadd.f32 %v73, %v76
    %vm78 = vweird.f32 %v72
    %vm79 = vweird.f32 %v73
    %vm80 = vmor %vm78, %vm79
    %v81 = vsel %vm80, %v73, %v77
    %v82 = vand.u32 2147483647, %v72
    %vm83 = vcmp.eq.f32.partialorder %v82, 8.507059e+37
    %v84 = vand.u32 %v72, 2147483648
    %v85 = vor.u32 1.1754944e-38, %v84
    %v86 = vsel %vm83, %v85, %v81
    %v87 = vmul.f32 %v71, %v86
    %vm88 = vcmp.ge.f32.partialorder %v87, 0.0
    %vm89 = vmand %vm70, %vm88
    %vm90 = vcmp.lt.f32.partialorder %v87, 0.0
    %vm91 = vmand %vm70, %vm90
    %vm92 = vmor %vm68, %vm89
    %v93 = vsel %vm67, %v87, 0.0
    %v94 = vsel %vm92, %v87, 0.0
    %v95 = vsel %vm67, %v65, 0.0
    %v96 = vmul.f32 %v87, %v64
    %v97 = vsub.f32 %v66, %v96
    %v98 = vsel %vm92, %v97, %v95
    %v99 = vsel %vm91, %v65, %v98
    %v100 = vmul.f32 %v87, %v63
    %v101 = vsub.f32 %v65, %v100
    %v102 = vsel %vm67, %v101, 0.0
    %v103 = vsel %vm68, %v65, %v102
    %v104 = vsel %vm70, -0.5, %v103
    %v105 = vsel %vm67, %v66, 0.0
    %v106 = vsel %vm89, %v66, %v105
    %v107 = vsel %vm91, %v65, %v106
    %v108 = vsel %vm89, -0.5, %v95
    %v109 = vsel %vm54, %v108, %v107
    %110 = vst [vmem:[#allocation5] sm:$0x1] %v109
    %v111 = vsel %vm54, %v93, %v94
    %112 = vst [vmem:[#allocation6] sm:$0x1] %v111
    %v113 = vsel %vm54, %v104, %v99
    %114 = vst [vmem:[#allocation8] sm:$0x1] %v113
    // Predicated region
    $region10: #{tpu_custom_call.1} parent=1 // pred_check
      _
    $region11: #{tpu_custom_call.1} parent=1 // pred_check_branch
      %116 = sbr.rel (0) target = $region13
    $region12: #{tpu_custom_call.1} parent=1 // pred_region
      %118 = vsyncadd [#allocation4], 0
      %s120 = sshll.u32 [#allocation5], 4
      %s121 = int_to_ptr.vmem [resolvable:$true] %s120
      %s122 = sshll.u32 %s1, 4
      %s123 = int_to_ptr.hbm [resolvable:$true] %s122
      %125 = dma.vmem_to_hbm [thread:$0]  %s121, 16, %s123, [#allocation4]
    $region13: #{tpu_custom_call.1} parent=1 // pred_fallthru
      _
    // Predicated region
    $region14: #{tpu_custom_call.1} parent=1 // pred_check
      _
    $region15: #{tpu_custom_call.1} parent=1 // pred_check_branch
      %127 = sbr.rel (0) target = $region17
    $region16: #{tpu_custom_call.1} parent=1 // pred_region
      %129 = vsyncadd [#allocation7], 0
      %s131 = sshll.u32 [#allocation6], 4
      %s132 = int_to_ptr.vmem [resolvable:$true] %s131
      %s133 = sshll.u32 %s2, 4
      %s134 = int_to_ptr.hbm [resolvable:$true] %s133
      %136 = dma.vmem_to_hbm [thread:$0]  %s132, 16, %s134, [#allocation7]
    $region17: #{tpu_custom_call.1} parent=1 // pred_fallthru
      _
    // Predicated region
    $region18: #{tpu_custom_call.1} parent=1 // pred_check
      _
    $region19: #{tpu_custom_call.1} parent=1 // pred_check_branch
      %138 = sbr.rel (0) target = $region21
    $region20: #{tpu_custom_call.1} parent=1 // pred_region
      %140 = vsyncadd [#allocation7], 0
      %s142 = sshll.u32 [#allocation8], 4
      %s143 = int_to_ptr.vmem [resolvable:$true] %s142
      %s144 = sshll.u32 %s3, 4
      %s145 = int_to_ptr.hbm [resolvable:$true] %s144
      %147 = dma.vmem_to_hbm [thread:$0]  %s143, 16, %s145, [#allocation7]
    $region21: #{tpu_custom_call.1} parent=1 // pred_fallthru
      _
    // Predicated region
    $region22: #{tpu_custom_call.1} parent=1 // pred_check
      _
    $region23: #{tpu_custom_call.1} parent=1 // pred_check_branch
      %149 = sbr.rel (0) target = $region25
    $region24: #{tpu_custom_call.1} parent=1 // pred_region
      %151 = dma.done [#allocation4], 16
    $region25: #{tpu_custom_call.1} parent=1 // pred_fallthru
      _
    // Predicated region
    $region26: #{tpu_custom_call.1} parent=1 // pred_check
      _
    $region27: #{tpu_custom_call.1} parent=1 // pred_check_branch
      %153 = sbr.rel (0) target = $region29
    $region28: #{tpu_custom_call.1} parent=1 // pred_region
      %155 = dma.done [#allocation7], 16
    $region29: #{tpu_custom_call.1} parent=1 // pred_fallthru
      _
    // Predicated region
    $region30: #{tpu_custom_call.1} parent=1 // pred_check
      _
    $region31: #{tpu_custom_call.1} parent=1 // pred_check_branch
      %157 = sbr.rel (0) target = $region33
    $region32: #{tpu_custom_call.1} parent=1 // pred_region
      %159 = dma.done [#allocation7], 16
    $region33: #{tpu_custom_call.1} parent=1 // pred_fallthru
      _
    %160 = vsyncpa [#allocation3], 1
    %161 = vsyncpa [#allocation4], 1
    %162 = vsyncpa [#allocation7], 1

</llo_original>
